<compile_context>
chip_gen: v6e
topology: v6e:2x2x1
jax: 0.10.0
libtpu: 0.0.40
codegen_flags: <defaults>
</compile_context>

<pallas_src>
import math

import jax
import jax.numpy as jnp
from jax.experimental import pallas as pl
from jax.experimental.pallas import tpu as pltpu


def _round_up(x, m):
    return ((x + m - 1) // m) * m


def meanpool_kernel(seqx_ref, src_ref, w1s_ref, w1c_ref, b1_ref, w2_ref, b2_ref,
                    out_ref):
    # 1/S is pre-folded into w1s, so a plain sum over the neighbor axis gives
    # the mean contribution.  seqx is the pre-concatenated, lane-padded
    # [TB, S, F+E] neighbor block.
    pooled = jnp.sum(seqx_ref[...], axis=1)                          # [TB, K_pad]

    # fc1 on the (virtual) concat [mean(seq|seq_e) | src], then ReLU.
    h = (jnp.dot(pooled, w1s_ref[...], preferred_element_type=jnp.float32)
         + jnp.dot(src_ref[...], w1c_ref[...], preferred_element_type=jnp.float32)
         + b1_ref[...])                                              # [TB, F_pad]
    h = jnp.maximum(h, 0.0)

    # fc2
    out = jnp.dot(h, w2_ref[...], preferred_element_type=jnp.float32) + b2_ref[...]
    out_ref[...] = out.astype(out_ref.dtype)


def mean_pool_forward(src, src_t, seq, seq_t, seq_e, unused, mask, params,
                      *, batch_tile=None):
    """Mirrors MeanPool.forward(src, src_t, seq, seq_t, seq_e, _, mask).

    `mask` is intentionally ignored (same as the PyTorch module), so padded
    neighbors are averaged into the mean exactly like the reference.
    """
    del src_t, seq_t, unused, mask  # unused by the PyTorch forward as well
    w1t, b1, w2t, b2 = params
    B, F = src.shape
    _, S, E = seq_e.shape
    K = F + E

    # Lane-align feature dims (last dims multiples of 128).
    F_pad = _round_up(F, 128)
    K_pad = _round_up(K, 128)

    # ---- parameter prep: fold the concat + 1/S mean into the fc1 weights ----
    w1_seq = w1t[:K, :] * (1.0 / float(S))       # rows hitting mean(seq|seq_e)
    w1_src = w1t[K:, :]                          # rows hitting src
    w1s = jnp.zeros((K_pad, F_pad), jnp.float32).at[:K, :F].set(w1_seq)
    w1c = jnp.zeros((F_pad, F_pad), jnp.float32).at[:F, :F].set(w1_src)
    w2p = jnp.zeros((F_pad, F_pad), jnp.float32).at[:F, :F].set(w2t)
    b1p = jnp.zeros((1, F_pad), jnp.float32).at[:, :F].set(b1)
    b2p = jnp.zeros((1, F_pad), jnp.float32).at[:, :F].set(b2)

    # ---- batch tile sized against scoped-VMEM (safe on v5e/v6e/v7x) --------
    if batch_tile is None:
        bytes_per_row = 2 * (S * K_pad + 2 * F_pad) * 4  # double-buffered f32
        batch_tile = (8 * 1024 * 1024) // max(bytes_per_row, 1)
        batch_tile = max(8, min(512, (batch_tile // 8) * 8))
    TB = min(batch_tile, _round_up(B, 8))
    B_pad = _round_up(B, TB)

    # ---- concat + pad inputs at the wrapper boundary ------------------------
    seqx = jnp.zeros((B_pad, S, K_pad), jnp.float32)
    seqx = seqx.at[:B, :, :F].set(seq).at[:B, :, F:K].set(seq_e)
    srcp = jnp.zeros((B_pad, F_pad), jnp.float32).at[:B, :F].set(src)

    grid = (B_pad // TB,)
    flops = 2 * B_pad * (K_pad * F_pad + 2 * F_pad * F_pad) + B_pad * S * K_pad
    bytes_accessed = 4 * (B_pad * S * K_pad + 2 * B_pad * F_pad
                          + K_pad * F_pad + 2 * F_pad * F_pad + 2 * F_pad)

    out_pad = pl.pallas_call(
        meanpool_kernel,
        out_shape=jax.ShapeDtypeStruct((B_pad, F_pad), src.dtype),
        grid=grid,
        in_specs=[
            # streamed, batch-tiled inputs (double-buffered by BlockSpec)
            pl.BlockSpec((TB, S, K_pad), lambda i: (i, 0, 0)),   # seq|seq_e
            pl.BlockSpec((TB, F_pad), lambda i: (i, 0)),         # src
            # weights/biases: constant index_map -> VMEM-resident across grid
            pl.BlockSpec((K_pad, F_pad), lambda i: (0, 0)),      # w1 (pooled rows)
            pl.BlockSpec((F_pad, F_pad), lambda i: (0, 0)),      # w1 (src rows)
            pl.BlockSpec((1, F_pad), lambda i: (0, 0)),          # b1
            pl.BlockSpec((F_pad, F_pad), lambda i: (0, 0)),      # w2
            pl.BlockSpec((1, F_pad), lambda i: (0, 0)),          # b2
        ],
        out_specs=pl.BlockSpec((TB, F_pad), lambda i: (i, 0)),
        compiler_params=pltpu.CompilerParams(
            dimension_semantics=("parallel",),
            vmem_limit_bytes=32 * 1024 * 1024,
        ),
        cost_estimate=pl.CostEstimate(
            flops=flops, transcendentals=0, bytes_accessed=bytes_accessed),
    )(seqx, srcp, w1s, w1c, b1p, w2p, b2p)

    return out_pad[:B, :F], None


def init_params(key, feat_dim, edge_dim):
    """Deterministic parameter init matching the module's shapes.
    fc1: Linear(edge_dim + 2*feat_dim -> feat_dim), xavier_normal_ weight
    fc2: Linear(feat_dim -> feat_dim),               xavier_normal_ weight
    Weights are stored as [in, out] (torch weight transposed).
    """
    d_in1 = edge_dim + 2 * feat_dim
    k1, k2, k3, k4 = jax.random.split(key, 4)
    std1 = math.sqrt(2.0 / (d_in1 + feat_dim))
    std2 = math.sqrt(2.0 / (feat_dim + feat_dim))
    w1t = jax.random.normal(k1, (d_in1, feat_dim), jnp.float32) * std1
    w2t = jax.random.normal(k2, (feat_dim, feat_dim), jnp.float32) * std2
    b1 = (jax.random.uniform(k3, (1, feat_dim), jnp.float32) - 0.5) * 0.1
    b2 = (jax.random.uniform(k4, (1, feat_dim), jnp.float32) - 0.5) * 0.1
    return (w1t, b1, w2t, b2)


def reference_forward(src, seq, seq_e, params):
    w1t, b1, w2t, b2 = params
    seq_x = jnp.concatenate([seq, seq_e], axis=2)
    hn = seq_x.mean(axis=1)
    x = jnp.concatenate([hn, src], axis=1)
    h = jnp.maximum(x @ w1t + b1, 0.0)
    return h @ w2t + b2


if __name__ == "__main__":
    B, S = 4, 8
    feat_dim, edge_dim = 32, 16

    key = jax.random.PRNGKey(0)
    kp, ks1, ks2, ks3 = jax.random.split(key, 4)

    params = init_params(kp, feat_dim, edge_dim)
    src = jax.random.normal(ks1, (B, feat_dim), jnp.float32)
    seq = jax.random.normal(ks2, (B, S, feat_dim), jnp.float32)
    seq_e = jax.random.normal(ks3, (B, S, edge_dim), jnp.float32)
    src_t = jnp.zeros((B, 1), jnp.float32)   # unused by forward
    seq_t = jnp.zeros((B, S), jnp.float32)   # unused by forward
    mask = jnp.zeros((B, S), jnp.float32)    # unused by forward

    out, aux = mean_pool_forward(src, src_t, seq, seq_t, seq_e, None, mask, params)
    out = jax.block_until_ready(out)
    assert aux is None
    assert out.shape == (B, feat_dim)

    ref = reference_forward(src, seq, seq_e, params)
    assert jnp.allclose(out, ref, atol=1e-5, rtol=1e-5)

    print("KERNEL_OK")
</pallas_src>

<mosaic_0001>
module attributes {stable_mosaic.version = 11 : i64} {
  func.func @meanpool_kernel(%arg0: i32, %arg1: memref<8x8x128xf32, #tpu.memory_space<vmem>>, %arg2: memref<8x128xf32, #tpu.memory_space<vmem>>, %arg3: memref<128x128xf32, #tpu.memory_space<vmem>>, %arg4: memref<128x128xf32, #tpu.memory_space<vmem>>, %arg5: memref<1x128xf32, #tpu.memory_space<vmem>>, %arg6: memref<128x128xf32, #tpu.memory_space<vmem>>, %arg7: memref<1x128xf32, #tpu.memory_space<vmem>>, %arg8: memref<8x128xf32, #tpu.memory_space<vmem>>) attributes {dimension_semantics = [#tpu.dimension_semantics<parallel>], iteration_bounds = array<i64: 1>, scalar_prefetch = 0 : i64, scratch_operands = 0 : i64, tpu.core_type = #tpu.core_type<tc>, window_params = [{transform_indices = @transform_0, window_bounds = array<i64: 8, 8, 128>}, {transform_indices = @transform_1, window_bounds = array<i64: 8, 128>}, {pipeline_mode = #tpu.pipeline_mode<synchronous>, transform_indices = @transform_2, window_bounds = array<i64: 128, 128>}, {pipeline_mode = #tpu.pipeline_mode<synchronous>, transform_indices = @transform_3, window_bounds = array<i64: 128, 128>}, {pipeline_mode = #tpu.pipeline_mode<synchronous>, transform_indices = @transform_4, window_bounds = array<i64: 1, 128>}, {pipeline_mode = #tpu.pipeline_mode<synchronous>, transform_indices = @transform_5, window_bounds = array<i64: 128, 128>}, {pipeline_mode = #tpu.pipeline_mode<synchronous>, transform_indices = @transform_6, window_bounds = array<i64: 1, 128>}, {transform_indices = @transform_7, window_bounds = array<i64: 8, 128>}]} {
    %c0 = arith.constant 0 : index
    %c0_0 = arith.constant 0 : index
    %c0_1 = arith.constant 0 : index
    %0 = vector.load %arg1[%c0, %c0_0, %c0_1] : memref<8x8x128xf32, #tpu.memory_space<vmem>>, vector<8x8x128xf32>
    %cst = arith.constant dense<0.000000e+00> : vector<8x128xf32>
    %1 = vector.multi_reduction <add>, %0, %cst [1] : vector<8x8x128xf32> to vector<8x128xf32>
    %c0_2 = arith.constant 0 : index
    %c0_3 = arith.constant 0 : index
    %2 = vector.load %arg3[%c0_2, %c0_3] : memref<128x128xf32, #tpu.memory_space<vmem>>, vector<128x128xf32>
    %cst_4 = arith.constant dense<0.000000e+00> : vector<8x128xf32>
    %3 = tpu.matmul %1, %2, %cst_4 {dimension_numbers = #tpu.dot_dimension_numbers<[1], [0], [0], [1], [0, 0, 1, 1], [], []>} : vector<8x128xf32>, vector<128x128xf32>, vector<8x128xf32> -> vector<8x128xf32>
    %c0_5 = arith.constant 0 : index
    %c0_6 = arith.constant 0 : index
    %4 = vector.load %arg2[%c0_5, %c0_6] : memref<8x128xf32, #tpu.memory_space<vmem>>, vector<8x128xf32>
    %c0_7 = arith.constant 0 : index
    %c0_8 = arith.constant 0 : index
    %5 = vector.load %arg4[%c0_7, %c0_8] : memref<128x128xf32, #tpu.memory_space<vmem>>, vector<128x128xf32>
    %cst_9 = arith.constant dense<0.000000e+00> : vector<8x128xf32>
    %6 = tpu.matmul %4, %5, %cst_9 {dimension_numbers = #tpu.dot_dimension_numbers<[1], [0], [0], [1], [0, 0, 1, 1], [], []>} : vector<8x128xf32>, vector<128x128xf32>, vector<8x128xf32> -> vector<8x128xf32>
    %7 = arith.addf %3, %6 : vector<8x128xf32>
    %c0_10 = arith.constant 0 : index
    %c0_11 = arith.constant 0 : index
    %8 = vector.load %arg5[%c0_10, %c0_11] : memref<1x128xf32, #tpu.memory_space<vmem>>, vector<1x128xf32>
    %9 = vector.broadcast %8 : vector<1x128xf32> to vector<8x128xf32>
    %10 = arith.addf %7, %9 : vector<8x128xf32>
    %cst_12 = arith.constant 0.000000e+00 : f32
    %11 = vector.broadcast %cst_12 : f32 to vector<8x128xf32>
    %12 = arith.maximumf %10, %11 : vector<8x128xf32>
    %c0_13 = arith.constant 0 : index
    %c0_14 = arith.constant 0 : index
    %13 = vector.load %arg6[%c0_13, %c0_14] : memref<128x128xf32, #tpu.memory_space<vmem>>, vector<128x128xf32>
    %cst_15 = arith.constant dense<0.000000e+00> : vector<8x128xf32>
    %14 = tpu.matmul %12, %13, %cst_15 {dimension_numbers = #tpu.dot_dimension_numbers<[1], [0], [0], [1], [0, 0, 1, 1], [], []>} : vector<8x128xf32>, vector<128x128xf32>, vector<8x128xf32> -> vector<8x128xf32>
    %c0_16 = arith.constant 0 : index
    %c0_17 = arith.constant 0 : index
    %15 = vector.load %arg7[%c0_16, %c0_17] : memref<1x128xf32, #tpu.memory_space<vmem>>, vector<1x128xf32>
    %16 = vector.broadcast %15 : vector<1x128xf32> to vector<8x128xf32>
    %17 = arith.addf %14, %16 : vector<8x128xf32>
    %c0_18 = arith.constant 0 : index
    %c0_19 = arith.constant 0 : index
    %18 = vector.load %arg8[%c0_18, %c0_19] : memref<8x128xf32, #tpu.memory_space<vmem>>, vector<8x128xf32>
    tpu.vector_store %arg8[%c0_18, %c0_19], %17 {strides = array<i32>} : memref<8x128xf32, #tpu.memory_space<vmem>>, vector<8x128xf32>,
    return
  }
  func.func @transform_0(%arg0: i32) -> (i32, i32, i32) {
    %c0_i32 = arith.constant 0 : i32
    %c0_i32_0 = arith.constant 0 : i32
    %c0_i32_1 = arith.constant 0 : i32
    return %arg0, %c0_i32, %c0_i32_0 : i32, i32, i32
  }
  func.func @transform_1(%arg0: i32) -> (i32, i32) {
    %c0_i32 = arith.constant 0 : i32
    %c0_i32_0 = arith.constant 0 : i32
    return %arg0, %c0_i32 : i32, i32
  }
  func.func @transform_2(%arg0: i32) -> (i32, i32) {
    %c0_i32 = arith.constant 0 : i32
    %c0_i32_0 = arith.constant 0 : i32
    %c0_i32_1 = arith.constant 0 : i32
    return %c0_i32, %c0_i32_0 : i32, i32
  }
  func.func @transform_3(%arg0: i32) -> (i32, i32) {
    %c0_i32 = arith.constant 0 : i32
    %c0_i32_0 = arith.constant 0 : i32
    %c0_i32_1 = arith.constant 0 : i32
    return %c0_i32, %c0_i32_0 : i32, i32
  }
  func.func @transform_4(%arg0: i32) -> (i32, i32) {
    %c0_i32 = arith.constant 0 : i32
    %c0_i32_0 = arith.constant 0 : i32
    %c0_i32_1 = arith.constant 0 : i32
    return %c0_i32, %c0_i32_0 : i32, i32
  }
  func.func @transform_5(%arg0: i32) -> (i32, i32) {
    %c0_i32 = arith.constant 0 : i32
    %c0_i32_0 = arith.constant 0 : i32
    %c0_i32_1 = arith.constant 0 : i32
    return %c0_i32, %c0_i32_0 : i32, i32
  }
  func.func @transform_6(%arg0: i32) -> (i32, i32) {
    %c0_i32 = arith.constant 0 : i32
    %c0_i32_0 = arith.constant 0 : i32
    %c0_i32_1 = arith.constant 0 : i32
    return %c0_i32, %c0_i32_0 : i32, i32
  }
  func.func @transform_7(%arg0: i32) -> (i32, i32) {
    %c0_i32 = arith.constant 0 : i32
    %c0_i32_0 = arith.constant 0 : i32
    return %arg0, %c0_i32 : i32, i32
  }
}

</mosaic_0001>

<llo_original>
// kernel: tpu_custom_call.1
$region0: #{tpu_custom_call.1}
  #allocation0 [shape = 'u32[]', space=smem, size = 0x4, offset = 0x4, fixed_abs, tag = 'smem constant byte address 0x4 - core index']
  #allocation1 [shape = 'u32[144,128]{1,0:T(1,128)}', space=vmem, size = 0x12000, scoped, tag = 'internal scratch']
  %s0 = inlined_call_operand.hbm [shape: f32[8,8,128], index: 0, kind: input, shape index: {}]
  %s1 = inlined_call_operand.hbm [shape: f32[8,128], index: 1, kind: input, shape index: {}]
  %s2 = inlined_call_operand.hbm [shape: f32[128,128], index: 2, kind: input, shape index: {}]
  %s3 = inlined_call_operand.hbm [shape: f32[128,128], index: 3, kind: input, shape index: {}]
  %s4 = inlined_call_operand.vmem [shape: f32[1,128], index: 4, kind: input, shape index: {}]
  %s5 = inlined_call_operand.hbm [shape: f32[128,128], index: 5, kind: input, shape index: {}]
  %s6 = inlined_call_operand.vmem [shape: f32[1,128], index: 6, kind: input, shape index: {}]
  %s7 = inlined_call_operand.hbm [shape: f32[8,128], index: 7, kind: output, shape index: {}]
  %s8 = sld [smem:[#allocation0]]
  $region58: #{tpu_custom_call.1} parent=0
    _
  %s10 = ssub.s32 1, %s8
  %s11 = scalar_select 0, %s10, %s8
  $region1: #{tpu_custom_call.1} parent=0
    #allocation2 [shape = 'u8[32768]{0}', space=vmem, size = 0x8000, scoped, tag = 'input window, operand 0, single buffered']
    #allocation3 [shape = 's32[1]{0}', space=sflag, size = 0x4, scoped, tag = 'scoped memory for tpu_custom_call.1']
    #allocation4 [shape = 's32[1]{0}', space=sflag, size = 0x4, scoped, tag = 'scoped memory for tpu_custom_call.1']
    #allocation5 [shape = 'u8[4096]{0}', space=vmem, size = 0x1000, scoped, tag = 'input window, operand 1, single buffered']
    #allocation6 [shape = 's32[1]{0}', space=sflag, size = 0x4, scoped, tag = 'scoped memory for tpu_custom_call.1']
    #allocation7 [shape = 'u8[65536]{0}', space=vmem, size = 0x10000, scoped, tag = 'input window, operand 2, single buffered']
    #allocation8 [shape = 'u8[65536]{0}', space=vmem, size = 0x10000, scoped, tag = 'input window, operand 3, single buffered']
    #allocation9 [shape = 's32[1]{0}', space=sflag, size = 0x4, scoped, tag = 'scoped memory for tpu_custom_call.1']
    #allocation10 [shape = 'u8[65536]{0}', space=vmem, size = 0x10000, scoped, tag = 'input window, operand 5, single buffered']
    #allocation11 [shape = 'u8[4096]{0}', space=vmem, size = 0x1000, scoped, tag = 'output window, operand 0, single buffered']
    %12 = vsyncpa [#allocation3], 0
    %13 = vsyncpa [#allocation6], 0
    %14 = vsyncpa [#allocation9], 0
    %15 = vsyncpa [#allocation4], 0
    // Predicated region
    $region2: #{tpu_custom_call.1} parent=1 // pred_check
      _
    $region3: #{tpu_custom_call.1} parent=1 // pred_check_branch
      %17 = sbr.rel (0) target = $region5
    $region4: #{tpu_custom_call.1} parent=1 // pred_region
      %s19 = ssub.s32 1024, 1024
      %20 = vsyncadd [#allocation3], %s19
      %s21 = sshll.u32 [#allocation2], 4
      %s22 = int_to_ptr.vmem [resolvable:$true] %s21
      %27 = dma.hbm_to_vmem [thread:$0]  %s0, 1024, %s22, [#allocation3], 128, 128, 8
    $region5: #{tpu_custom_call.1} parent=1 // pred_fallthru
      _
    // Predicated region
    $region6: #{tpu_custom_call.1} parent=1 // pred_check
      _
    $region7: #{tpu_custom_call.1} parent=1 // pred_check_branch
      %29 = sbr.rel (0) target = $region9
    $region8: #{tpu_custom_call.1} parent=1 // pred_region
      %s31 = ssub.s32 128, 128
      %32 = vsyncadd [#allocation6], %s31
      %s34 = sshll.u32 [#allocation5], 4
      %s35 = int_to_ptr.vmem [resolvable:$true] %s34
      %37 = dma.hbm_to_vmem [thread:$0]  %s1, 128, %s35, [#allocation6]
    $region9: #{tpu_custom_call.1} parent=1 // pred_fallthru
      _
    // Predicated region
    $region10: #{tpu_custom_call.1} parent=1 // pred_check
      _
    $region11: #{tpu_custom_call.1} parent=1 // pred_check_branch
      %39 = sbr.rel (0) target = $region13
    $region12: #{tpu_custom_call.1} parent=1 // pred_region
      %s41 = ssub.s32 2048, 2048
      %42 = vsyncadd [#allocation6], %s41
      %s43 = sshll.u32 [#allocation7], 4
      %s44 = int_to_ptr.vmem [resolvable:$true] %s43
      %49 = dma.hbm_to_vmem [thread:$0]  %s2, 2048, %s44, [#allocation6], 128, 128, 8
    $region13: #{tpu_custom_call.1} parent=1 // pred_fallthru
      _
    // Predicated region
    $region14: #{tpu_custom_call.1} parent=1 // pred_check
      _
    $region15: #{tpu_custom_call.1} parent=1 // pred_check_branch
      %51 = sbr.rel (0) target = $region17
    $region16: #{tpu_custom_call.1} parent=1 // pred_region
      %s53 = ssub.s32 2048, 2048
      %54 = vsyncadd [#allocation9], %s53
      %s55 = sshll.u32 [#allocation8], 4
      %s56 = int_to_ptr.vmem [resolvable:$true] %s55
      %61 = dma.hbm_to_vmem [thread:$0]  %s3, 2048, %s56, [#allocation9], 128, 128, 8
    $region17: #{tpu_custom_call.1} parent=1 // pred_fallthru
      _
    // Predicated region
    $region18: #{tpu_custom_call.1} parent=1 // pred_check
      _
    $region19: #{tpu_custom_call.1} parent=1 // pred_check_branch
      %63 = sbr.rel (0) target = $region21
    $region20: #{tpu_custom_call.1} parent=1 // pred_region
      _
    $region21: #{tpu_custom_call.1} parent=1 // pred_fallthru
      _
    // Predicated region
    $region22: #{tpu_custom_call.1} parent=1 // pred_check
      _
    $region23: #{tpu_custom_call.1} parent=1 // pred_check_branch
      %65 = sbr.rel (0) target = $region25
    $region24: #{tpu_custom_call.1} parent=1 // pred_region
      %s67 = ssub.s32 2048, 2048
      %68 = vsyncadd [#allocation9], %s67
      %s69 = sshll.u32 [#allocation10], 4
      %s70 = int_to_ptr.vmem [resolvable:$true] %s69
      %75 = dma.hbm_to_vmem [thread:$0]  %s5, 2048, %s70, [#allocation9], 128, 128, 8
    $region25: #{tpu_custom_call.1} parent=1 // pred_fallthru
      _
    // Predicated region
    $region26: #{tpu_custom_call.1} parent=1 // pred_check
      _
    $region27: #{tpu_custom_call.1} parent=1 // pred_check_branch
      %77 = sbr.rel (0) target = $region29
    $region28: #{tpu_custom_call.1} parent=1 // pred_region
      _
    $region29: #{tpu_custom_call.1} parent=1 // pred_fallthru
      _
    // Predicated region
    $region30: #{tpu_custom_call.1} parent=1 // pred_check
      _
    $region31: #{tpu_custom_call.1} parent=1 // pred_check_branch
      %79 = sbr.rel (0) target = $region33
    $region32: #{tpu_custom_call.1} parent=1 // pred_region
      %80 = dma.done [#allocation3], 1024
    $region33: #{tpu_custom_call.1} parent=1 // pred_fallthru
      _
    // Predicated region
    $region34: #{tpu_custom_call.1} parent=1 // pred_check
      _
    $region35: #{tpu_custom_call.1} parent=1 // pred_check_branch
      %82 = sbr.rel (0) target = $region37
    $region36: #{tpu_custom_call.1} parent=1 // pred_region
      %83 = dma.done [#allocation6], 128
    $region37: #{tpu_custom_call.1} parent=1 // pred_fallthru
      _
    // Predicated region
    $region38: #{tpu_custom_call.1} parent=1 // pred_check
      _
    $region39: #{tpu_custom_call.1} parent=1 // pred_check_branch
      %85 = sbr.rel (0) target = $region41
    $region40: #{tpu_custom_call.1} parent=1 // pred_region
      %86 = dma.done [#allocation6], 2048
    $region41: #{tpu_custom_call.1} parent=1 // pred_fallthru
      _
    // Predicated region
    $region42: #{tpu_custom_call.1} parent=1 // pred_check
      _
    $region43: #{tpu_custom_call.1} parent=1 // pred_check_branch
      %88 = sbr.rel (0) target = $region45
    $region44: #{tpu_custom_call.1} parent=1 // pred_region
      %89 = dma.done [#allocation9], 2048
    $region45: #{tpu_custom_call.1} parent=1 // pred_fallthru
      _
    // Predicated region
    $region46: #{tpu_custom_call.1} parent=1 // pred_check
      _
    $region47: #{tpu_custom_call.1} parent=1 // pred_check_branch
      %91 = sbr.rel (0) target = $region49
    $region48: #{tpu_custom_call.1} parent=1 // pred_region
      %92 = dma.done [#allocation9], 2048
    $region49: #{tpu_custom_call.1} parent=1 // pred_fallthru
      _
    %v93 = vld [vmem:[#allocation2] sm:$0xff]
    %v94 = vld [vmem:[#allocation2 + $0x8] sm:$0xff]
    %v95 = vld [vmem:[#allocation2 + $0x10] sm:$0xff]
    %v96 = vld [vmem:[#allocation2 + $0x18] sm:$0xff]
    %v97 = vld [vmem:[#allocation2 + $0x20] sm:$0xff]
    %v98 = vld [vmem:[#allocation2 + $0x28] sm:$0xff]
    %v99 = vld [vmem:[#allocation2 + $0x30] sm:$0xff]
    %v100 = vld [vmem:[#allocation2 + $0x38] sm:$0xff]
    %v101 = vrot.slane %v93, 4
    %v102 = vadd.f32 %v93, %v101
    %v103 = vrot.slane %v102, 2
    %v104 = vadd.f32 %v102, %v103
    %v105 = vrot.slane %v104, 1
    %v106 = vadd.f32 %v104, %v105
    %v107 = vrot.slane %v94, 4
    %v108 = vadd.f32 %v94, %v107
    %v109 = vrot.slane %v108, 2
    %v110 = vadd.f32 %v108, %v109
    %v111 = vrot.slane %v110, 1
    %v112 = vadd.f32 %v110, %v111
    %v113 = vrot.slane %v95, 4
    %v114 = vadd.f32 %v95, %v113
    %v115 = vrot.slane %v114, 2
    %v116 = vadd.f32 %v114, %v115
    %v117 = vrot.slane %v116, 1
    %v118 = vadd.f32 %v116, %v117
    %v119 = vrot.slane %v96, 4
    %v120 = vadd.f32 %v96, %v119
    %v121 = vrot.slane %v120, 2
    %v122 = vadd.f32 %v120, %v121
    %v123 = vrot.slane %v122, 1
    %v124 = vadd.f32 %v122, %v123
    %v125 = vrot.slane %v97, 4
    %v126 = vadd.f32 %v97, %v125
    %v127 = vrot.slane %v126, 2
    %v128 = vadd.f32 %v126, %v127
    %v129 = vrot.slane %v128, 1
    %v130 = vadd.f32 %v128, %v129
    %v131 = vrot.slane %v98, 4
    %v132 = vadd.f32 %v98, %v131
    %v133 = vrot.slane %v132, 2
    %v134 = vadd.f32 %v132, %v133
    %v135 = vrot.slane %v134, 1
    %v136 = vadd.f32 %v134, %v135
    %v137 = vrot.slane %v99, 4
    %v138 = vadd.f32 %v99, %v137
    %v139 = vrot.slane %v138, 2
    %v140 = vadd.f32 %v138, %v139
    %v141 = vrot.slane %v140, 1
    %v142 = vadd.f32 %v140, %v141
    %v143 = vrot.slane %v100, 4
    %v144 = vadd.f32 %v100, %v143
    %v145 = vrot.slane %v144, 2
    %v146 = vadd.f32 %v144, %v145
    %v147 = vrot.slane %v146, 1
    %v148 = vadd.f32 %v146, %v147
    %v149 = vld [vmem:[#allocation7] sm:$0xff]
    %v150 = vld [vmem:[#allocation7 + $0x8] sm:$0xff]
    %v151 = vld [vmem:[#allocation7 + $0x10] sm:$0xff]
    %v152 = vld [vmem:[#allocation7 + $0x18] sm:$0xff]
    %v153 = vld [vmem:[#allocation7 + $0x20] sm:$0xff]
    %v154 = vld [vmem:[#allocation7 + $0x28] sm:$0xff]
    %v155 = vld [vmem:[#allocation7 + $0x30] sm:$0xff]
    %v156 = vld [vmem:[#allocation7 + $0x38] sm:$0xff]
    %v157 = vld [vmem:[#allocation7 + $0x40] sm:$0xff]
    %v158 = vld [vmem:[#allocation7 + $0x48] sm:$0xff]
    %v159 = vld [vmem:[#allocation7 + $0x50] sm:$0xff]
    %v160 = vld [vmem:[#allocation7 + $0x58] sm:$0xff]
    %v161 = vld [vmem:[#allocation7 + $0x60] sm:$0xff]
    %v162 = vld [vmem:[#allocation7 + $0x68] sm:$0xff]
    %v163 = vld [vmem:[#allocation7 + $0x70] sm:$0xff]
    %v164 = vld [vmem:[#allocation7 + $0x78] sm:$0xff]
    %v165 = vld [vmem:[#allocation5] sm:$0xff]
    %v166 = vld [vmem:[#allocation8] sm:$0xff]
    %v167 = vld [vmem:[#allocation8 + $0x8] sm:$0xff]
    %v168 = vld [vmem:[#allocation8 + $0x10] sm:$0xff]
    %v169 = vld [vmem:[#allocation8 + $0x18] sm:$0xff]
    %v170 = vld [vmem:[#allocation8 + $0x20] sm:$0xff]
    %v171 = vld [vmem:[#allocation8 + $0x28] sm:$0xff]
    %v172 = vld [vmem:[#allocation8 + $0x30] sm:$0xff]
    %v173 = vld [vmem:[#allocation8 + $0x38] sm:$0xff]
    %v174 = vld [vmem:[#allocation8 + $0x40] sm:$0xff]
    %v175 = vld [vmem:[#allocation8 + $0x48] sm:$0xff]
    %v176 = vld [vmem:[#allocation8 + $0x50] sm:$0xff]
    %v177 = vld [vmem:[#allocation8 + $0x58] sm:$0xff]
    %v178 = vld [vmem:[#allocation8 + $0x60] sm:$0xff]
    %v179 = vld [vmem:[#allocation8 + $0x68] sm:$0xff]
    %v180 = vld [vmem:[#allocation8 + $0x70] sm:$0xff]
    %v181 = vld [vmem:[#allocation8 + $0x78] sm:$0xff]
    %182 = vmatprep.subr.mxu0 0.0
    %183 = vmatpush1.msra.mxu0 %v181
    %184 = vmatprep.subr.mxu0 0.0
    %185 = vmatpush1.msra.mxu0 %v180
    %186 = vmatprep.subr.mxu0 0.0
    %187 = vmatpush1.msra.mxu0 %v179
    %188 = vmatprep.subr.mxu0 0.0
    %189 = vmatpush1.msra.mxu0 %v178
    %190 = vmatprep.subr.mxu0 0.0
    %191 = vmatpush1.msra.mxu0 %v177
    %192 = vmatprep.subr.mxu0 0.0
    %193 = vmatpush1.msra.mxu0 %v176
    %194 = vmatprep.subr.mxu0 0.0
    %195 = vmatpush1.msra.mxu0 %v175
    %196 = vmatprep.subr.mxu0 0.0
    %197 = vmatpush1.msra.mxu0 %v174
    %198 = vmatprep.subr.mxu0 0.0
    %199 = vmatpush1.msra.mxu0 %v173
    %200 = vmatprep.subr.mxu0 0.0
    %201 = vmatpush1.msra.mxu0 %v172
    %202 = vmatprep.subr.mxu0 0.0
    %203 = vmatpush1.msra.mxu0 %v171
    %204 = vmatprep.subr.mxu0 0.0
    %205 = vmatpush1.msra.mxu0 %v170
    %206 = vmatprep.subr.mxu0 0.0
    %207 = vmatpush1.msra.mxu0 %v169
    %208 = vmatprep.subr.mxu0 0.0
    %209 = vmatpush1.msra.mxu0 %v168
    %210 = vmatprep.subr.mxu0 0.0
    %211 = vmatpush1.msra.mxu0 %v167
    %212 = vmatprep.subr.mxu0 0.0
    %213 = vmatpush1.msra.mxu0 %v166
    %214 = vmatprep.subr.mxu0 0.0
    %215 = vmatpush2.msra.mxu0 0.0
    %216 = vmatprep.subr.mxu0 0.0
    %217 = vmatpush2.msra.mxu0 0.0
    %218 = vmatprep.subr.mxu0 0.0
    %219 = vmatpush2.msra.mxu0 0.0
    %220 = vmatprep.subr.mxu0 0.0
    %221 = vmatpush2.msra.mxu0 0.0
    %222 = vmatprep.subr.mxu0 0.0
    %223 = vmatpush2.msra.mxu0 0.0
    %224 = vmatprep.subr.mxu0 0.0
    %225 = vmatpush2.msra.mxu0 0.0
    %226 = vmatprep.subr.mxu0 0.0
    %227 = vmatpush2.msra.mxu0 0.0
    %228 = vmatprep.subr.mxu0 0.0
    %229 = vmatpush2.msra.mxu0 0.0
    %230 = vmatprep.subr.mxu0 0.0
    %231 = vmatpush2.msra.mxu0 0.0
    %232 = vmatprep.subr.mxu0 0.0
    %233 = vmatpush2.msra.mxu0 0.0
    %234 = vmatprep.subr.mxu0 0.0
    %235 = vmatpush2.msra.mxu0 0.0
    %236 = vmatprep.subr.mxu0 0.0
    %237 = vmatpush2.msra.mxu0 0.0
    %238 = vmatprep.subr.mxu0 0.0
    %239 = vmatpush2.msra.mxu0 0.0
    %240 = vmatprep.subr.mxu0 0.0
    %241 = vmatpush2.msra.mxu0 0.0
    %242 = vmatprep.subr.mxu0 0.0
    %243 = vmatpush2.msra.mxu0 0.0
    %244 = vmatprep.subr.mxu0 0.0
    %245 = vmatpush2.msra.mxu0 0.0
    %246 = vmatprep.mubr.f32.mxu0 0.0
    %247 = vmatmul.mubr.f32.gmra.mxu0 %v165
    %v248 = vpop.f32.mrf.mxu0
    %v249 = vadd.f32 0.0, %v248
    %v250 = vpop.f32.mrf.mxu0
    %251 = vdwg.mxu0
    %vm260 = vcmask 1041409
    %v261 = vsel %vm260, %v112, %v106
    %vm262 = vcmask 1042434
    %v263 = vsel %vm262, %v118, %v261
    %vm264 = vcmask 1043459
    %v265 = vsel %vm264, %v124, %v263
    %vm266 = vcmask 1044484
    %v267 = vsel %vm266, %v130, %v265
    %vm268 = vcmask 1045509
    %v269 = vsel %vm268, %v136, %v267
    %vm270 = vcmask 1046534
    %v271 = vsel %vm270, %v142, %v269
    %vm272 = vcmask 1047559
    %v273 = vsel %vm272, %v148, %v271
    %275 = vmatprep.subr.mxu0 0.0
    %276 = vmatpush1.msra.mxu0 %v164
    %277 = vmatprep.subr.mxu0 0.0
    %278 = vmatpush1.msra.mxu0 %v163
    %279 = vmatprep.subr.mxu0 0.0
    %280 = vmatpush1.msra.mxu0 %v162
    %281 = vmatprep.subr.mxu0 0.0
    %282 = vmatpush1.msra.mxu0 %v161
    %283 = vmatprep.subr.mxu0 0.0
    %284 = vmatpush1.msra.mxu0 %v160
    %285 = vmatprep.subr.mxu0 0.0
    %286 = vmatpush1.msra.mxu0 %v159
    %287 = vmatprep.subr.mxu0 0.0
    %288 = vmatpush1.msra.mxu0 %v158
    %289 = vmatprep.subr.mxu0 0.0
    %290 = vmatpush1.msra.mxu0 %v157
    %291 = vmatprep.subr.mxu0 0.0
    %292 = vmatpush1.msra.mxu0 %v156
    %293 = vmatprep.subr.mxu0 0.0
    %294 = vmatpush1.msra.mxu0 %v155
    %295 = vmatprep.subr.mxu0 0.0
    %296 = vmatpush1.msra.mxu0 %v154
    %297 = vmatprep.subr.mxu0 0.0
    %298 = vmatpush1.msra.mxu0 %v153
    %299 = vmatprep.subr.mxu0 0.0
    %300 = vmatpush1.msra.mxu0 %v152
    %301 = vmatprep.subr.mxu0 0.0
    %302 = vmatpush1.msra.mxu0 %v151
    %303 = vmatprep.subr.mxu0 0.0
    %304 = vmatpush1.msra.mxu0 %v150
    %305 = vmatprep.subr.mxu0 0.0
    %306 = vmatpush1.msra.mxu0 %v149
    %307 = vmatprep.subr.mxu0 0.0
    %308 = vmatpush2.msra.mxu0 0.0
    %309 = vmatprep.subr.mxu0 0.0
    %310 = vmatpush2.msra.mxu0 0.0
    %311 = vmatprep.subr.mxu0 0.0
    %312 = vmatpush2.msra.mxu0 0.0
    %313 = vmatprep.subr.mxu0 0.0
    %314 = vmatpush2.msra.mxu0 0.0
    %315 = vmatprep.subr.mxu0 0.0
    %316 = vmatpush2.msra.mxu0 0.0
    %317 = vmatprep.subr.mxu0 0.0
    %318 = vmatpush2.msra.mxu0 0.0
    %319 = vmatprep.subr.mxu0 0.0
    %320 = vmatpush2.msra.mxu0 0.0
    %321 = vmatprep.subr.mxu0 0.0
    %322 = vmatpush2.msra.mxu0 0.0
    %323 = vmatprep.subr.mxu0 0.0
    %324 = vmatpush2.msra.mxu0 0.0
    %325 = vmatprep.subr.mxu0 0.0
    %326 = vmatpush2.msra.mxu0 0.0
    %327 = vmatprep.subr.mxu0 0.0
    %328 = vmatpush2.msra.mxu0 0.0
    %329 = vmatprep.subr.mxu0 0.0
    %330 = vmatpush2.msra.mxu0 0.0
    %331 = vmatprep.subr.mxu0 0.0
    %332 = vmatpush2.msra.mxu0 0.0
    %333 = vmatprep.subr.mxu0 0.0
    %334 = vmatpush2.msra.mxu0 0.0
    %335 = vmatprep.subr.mxu0 0.0
    %336 = vmatpush2.msra.mxu0 0.0
    %337 = vmatprep.subr.mxu0 0.0
    %338 = vmatpush2.msra.mxu0 0.0
    %339 = vmatprep.mubr.f32.mxu0 0.0
    %340 = vmatmul.mubr.f32.gmra.mxu0 %v273
    %v341 = vpop.f32.mrf.mxu0
    %v342 = vadd.f32 %v249, %v341
    %v343 = vpop.f32.mrf.mxu0
    %344 = vdwg.mxu0
    %v345 = vld [vmem:[%s4] sm:$0x1]
    %v347 = vlaneseq
    %v348 = vshrl.u32 %v347, 7
    %v349 = vsub.s32 0, %v348
    %v350 = vrot.slane %v345, %v349
    %v352 = vadd.f32 %v342, %v350
    %v353 = vmax.f32 %v352, 0.0
    %v354 = vld [vmem:[#allocation10] sm:$0xff]
    %v355 = vld [vmem:[#allocation10 + $0x8] sm:$0xff]
    %v356 = vld [vmem:[#allocation10 + $0x10] sm:$0xff]
    %v357 = vld [vmem:[#allocation10 + $0x18] sm:$0xff]
    %v358 = vld [vmem:[#allocation10 + $0x20] sm:$0xff]
    %v359 = vld [vmem:[#allocation10 + $0x28] sm:$0xff]
    %v360 = vld [vmem:[#allocation10 + $0x30] sm:$0xff]
    %v361 = vld [vmem:[#allocation10 + $0x38] sm:$0xff]
    %v362 = vld [vmem:[#allocation10 + $0x40] sm:$0xff]
    %v363 = vld [vmem:[#allocation10 + $0x48] sm:$0xff]
    %v364 = vld [vmem:[#allocation10 + $0x50] sm:$0xff]
    %v365 = vld [vmem:[#allocation10 + $0x58] sm:$0xff]
    %v366 = vld [vmem:[#allocation10 + $0x60] sm:$0xff]
    %v367 = vld [vmem:[#allocation10 + $0x68] sm:$0xff]
    %v368 = vld [vmem:[#allocation10 + $0x70] sm:$0xff]
    %v369 = vld [vmem:[#allocation10 + $0x78] sm:$0xff]
    %v370 = vld [vmem:[%s6] sm:$0x1]
    %v372 = vlaneseq
    %v373 = vshrl.u32 %v372, 7
    %v374 = vsub.s32 0, %v373
    %v375 = vrot.slane %v370, %v374
    %377 = vmatprep.subr.mxu0 0.0
    %378 = vmatpush1.msra.mxu0 %v369
    %379 = vmatprep.subr.mxu0 0.0
    %380 = vmatpush1.msra.mxu0 %v368
    %381 = vmatprep.subr.mxu0 0.0
    %382 = vmatpush1.msra.mxu0 %v367
    %383 = vmatprep.subr.mxu0 0.0
    %384 = vmatpush1.msra.mxu0 %v366
    %385 = vmatprep.subr.mxu0 0.0
    %386 = vmatpush1.msra.mxu0 %v365
    %387 = vmatprep.subr.mxu0 0.0
    %388 = vmatpush1.msra.mxu0 %v364
    %389 = vmatprep.subr.mxu0 0.0
    %390 = vmatpush1.msra.mxu0 %v363
    %391 = vmatprep.subr.mxu0 0.0
    %392 = vmatpush1.msra.mxu0 %v362
    %393 = vmatprep.subr.mxu0 0.0
    %394 = vmatpush1.msra.mxu0 %v361
    %395 = vmatprep.subr.mxu0 0.0
    %396 = vmatpush1.msra.mxu0 %v360
    %397 = vmatprep.subr.mxu0 0.0
    %398 = vmatpush1.msra.mxu0 %v359
    %399 = vmatprep.subr.mxu0 0.0
    %400 = vmatpush1.msra.mxu0 %v358
    %401 = vmatprep.subr.mxu0 0.0
    %402 = vmatpush1.msra.mxu0 %v357
    %403 = vmatprep.subr.mxu0 0.0
    %404 = vmatpush1.msra.mxu0 %v356
    %405 = vmatprep.subr.mxu0 0.0
    %406 = vmatpush1.msra.mxu0 %v355
    %407 = vmatprep.subr.mxu0 0.0
    %408 = vmatpush1.msra.mxu0 %v354
    %409 = vmatprep.subr.mxu0 0.0
    %410 = vmatpush2.msra.mxu0 0.0
    %411 = vmatprep.subr.mxu0 0.0
    %412 = vmatpush2.msra.mxu0 0.0
    %413 = vmatprep.subr.mxu0 0.0
    %414 = vmatpush2.msra.mxu0 0.0
    %415 = vmatprep.subr.mxu0 0.0
    %416 = vmatpush2.msra.mxu0 0.0
    %417 = vmatprep.subr.mxu0 0.0
    %418 = vmatpush2.msra.mxu0 0.0
    %419 = vmatprep.subr.mxu0 0.0
    %420 = vmatpush2.msra.mxu0 0.0
    %421 = vmatprep.subr.mxu0 0.0
    %422 = vmatpush2.msra.mxu0 0.0
    %423 = vmatprep.subr.mxu0 0.0
    %424 = vmatpush2.msra.mxu0 0.0
    %425 = vmatprep.subr.mxu0 0.0
    %426 = vmatpush2.msra.mxu0 0.0
    %427 = vmatprep.subr.mxu0 0.0
    %428 = vmatpush2.msra.mxu0 0.0
    %429 = vmatprep.subr.mxu0 0.0
    %430 = vmatpush2.msra.mxu0 0.0
    %431 = vmatprep.subr.mxu0 0.0
    %432 = vmatpush2.msra.mxu0 0.0
    %433 = vmatprep.subr.mxu0 0.0
    %434 = vmatpush2.msra.mxu0 0.0
    %435 = vmatprep.subr.mxu0 0.0
    %436 = vmatpush2.msra.mxu0 0.0
    %437 = vmatprep.subr.mxu0 0.0
    %438 = vmatpush2.msra.mxu0 0.0
    %439 = vmatprep.subr.mxu0 0.0
    %440 = vmatpush2.msra.mxu0 0.0
    %441 = vmatprep.mubr.f32.mxu0 0.0
    %442 = vmatmul.mubr.f32.gmra.mxu0 %v353
    %v443 = vpop.f32.mrf.mxu0
    %v444 = vadd.f32 %v375, %v443
    %v445 = vpop.f32.mrf.mxu0
    %446 = vdwg.mxu0
    %447 = vst [vmem:[#allocation11] sm:$0xff] %v444
    // Predicated region
    $region50: #{tpu_custom_call.1} parent=1 // pred_check
      _
    $region51: #{tpu_custom_call.1} parent=1 // pred_check_branch
      %449 = sbr.rel (0) target = $region53
    $region52: #{tpu_custom_call.1} parent=1 // pred_region
      %s451 = ssub.s32 128, 128
      %452 = vsyncadd [#allocation4], %s451
      %s454 = sshll.u32 [#allocation11], 4
      %s455 = int_to_ptr.vmem [resolvable:$true] %s454
      %457 = dma.vmem_to_hbm [thread:$0]  %s455, 128, %s7, [#allocation4]
    $region53: #{tpu_custom_call.1} parent=1 // pred_fallthru
      _
    // Predicated region
    $region54: #{tpu_custom_call.1} parent=1 // pred_check
      _
    $region55: #{tpu_custom_call.1} parent=1 // pred_check_branch
      %459 = sbr.rel (0) target = $region57
    $region56: #{tpu_custom_call.1} parent=1 // pred_region
      %460 = dma.done [#allocation4], 128
    $region57: #{tpu_custom_call.1} parent=1 // pred_fallthru
      _
    %461 = vsyncpa [#allocation3], 1
    %462 = vsyncpa [#allocation6], 1
    %463 = vsyncpa [#allocation9], 1
    %464 = vsyncpa [#allocation4], 1

</llo_original>
